<compile_context>
chip_gen: v7x
topology: tpu7x:2x2x1
jax: 0.10.0
libtpu: 0.0.40
codegen_flags: <defaults>
</compile_context>

<pallas_src>
import functools

import jax
import jax.numpy as jnp
import numpy as np
from jax.experimental import pallas as pl
from jax.experimental.pallas import tpu as pltpu


def _focal_tile_kernel(logits_ref, labels_ref, weights_ref, out_ref, *,
                       tile_rows, eps, gamma):
    """One row-tile of the class-balanced label-smoothed focal loss.

    logits_ref : (tile_rows, C) native dtype   -- tiled over the row grid
    labels_ref : (N_pad, 1)    int32           -- resident, sliced with pl.ds
    weights_ref: (1, C)        float32         -- resident class-balanced weights
    out_ref    : (1, 1, 128)   float32         -- this tile's partial sum (lane-broadcast)
    """
    row0 = pl.multiple_of(pl.program_id(0) * tile_rows, tile_rows)

    x = logits_ref[...].astype(jnp.float32)                    # (TM, C)
    tm, c = x.shape

    lab = labels_ref[pl.ds(row0, tile_rows), :]                 # (TM, 1) int32
    w_row = weights_ref[...].astype(jnp.float32)                # (1, C)
    w_sum = jnp.sum(w_row)                                      # scalar

    lane = jax.lax.broadcasted_iota(jnp.int32, (tm, c), 1)      # (TM, C)
    one_hot = lane == lab                                       # (TM, C) bool
    valid = (lab >= 0).astype(jnp.float32)                      # (TM, 1) mask for padded rows

    # Label smoothing: t = (1-eps) * one_hot + eps / C
    t = eps / c + (1.0 - eps) * one_hot.astype(jnp.float32)     # (TM, C)

    # Class-balanced per-example weight:
    #   alpha_i = sum_c weights[c] * t[i, c] = (1-eps) * weights[label_i] + (eps/C) * sum(weights)
    w_at_label = jnp.sum(jnp.where(one_hot, w_row, 0.0), axis=-1, keepdims=True)  # (TM, 1)
    alpha = (1.0 - eps) * w_at_label + (eps / c) * w_sum                            # (TM, 1)

    # Stable softplus(-x) = log(1 + exp(-x))
    sp = jnp.maximum(-x, 0.0) + jnp.log(1.0 + jnp.exp(-jnp.abs(x)))
    # BCE-with-logits (elementwise): (1 - t) * x + softplus(-x)
    bce = (1.0 - t) * x + sp
    if gamma == 0.0:
        loss = bce
    else:
        # focal modulator: exp(-gamma * (t * x + log(1 + exp(-x))))
        loss = jnp.exp(-gamma * (t * x + sp)) * bce

    weighted = (alpha * valid) * loss                           # (TM, C)
    partial = jnp.sum(weighted)                                 # scalar

    out_ref[...] = jnp.broadcast_to(
        partial.reshape(1, 1, 1), out_ref.shape).astype(jnp.float32)


def _pick_tile_rows(n, c, itemsize):
    """Largest row tile that comfortably fits the per-generation VMEM budget."""
    sublane = {4: 8, 2: 16, 1: 32}.get(int(itemsize), 8)
    try:
        vmem_bytes = int(pltpu.get_tpu_info().vmem_capacity_bytes)
    except Exception:  # pragma: no cover - conservative fallback
        vmem_bytes = 64 << 20  # v7x per-TensorCore VMEM (smallest of the generations)
    # double-buffered native-dtype logits tile + ~8 f32-sized in-kernel temporaries / element
    per_row_bytes = c * (2 * itemsize + 8 * 4)
    budget = vmem_bytes // 3
    tile_rows = max(sublane, min(1024, budget // max(per_row_bytes, 1)))
    tile_rows = max(sublane, (tile_rows // sublane) * sublane)
    n_rounded = ((n + sublane - 1) // sublane) * sublane
    tile_rows = max(sublane, min(tile_rows, n_rounded))
    return tile_rows, vmem_bytes


def label_sm_focal(logits, labels, *, beta=0.9, gamma=2.0, epsilon=0.1):
    """Pallas implementation of LabelSM_Focal.forward (loss_type='focal')."""
    n, c = logits.shape
    labels = labels.astype(jnp.int32)

    # ---- tiny prep in plain JAX: class-balanced weight vector (matches the PyTorch module) ----
    counts = jnp.zeros((c,), jnp.float32).at[labels].add(1.0)          # samples_per_cls
    effective_num = 1.0 - jnp.power(jnp.float32(beta), counts)
    weights = (1.0 - beta) / (effective_num + 1e-8)
    weights = weights / jnp.sum(weights) * c                           # (C,)

    itemsize = jnp.dtype(logits.dtype).itemsize
    tile_rows, vmem_bytes = _pick_tile_rows(n, c, itemsize)

    num_tiles = -(-n // tile_rows)                                     # cdiv
    n_pad = num_tiles * tile_rows
    if n_pad != n:
        logits = jnp.pad(logits, ((0, n_pad - n), (0, 0)))
        labels = jnp.pad(labels, (0, n_pad - n), constant_values=-1)   # masked in-kernel

    labels2d = labels.reshape(n_pad, 1)
    weights2d = weights.reshape(1, c).astype(jnp.float32)

    kernel = functools.partial(_focal_tile_kernel, tile_rows=tile_rows,
                               eps=float(epsilon), gamma=float(gamma))

    vmem_need = (2 * tile_rows * c * itemsize      # double-buffered logits tile
                 + 8 * tile_rows * c * 4           # in-kernel f32 temporaries
                 + 2 * n_pad * 128 * 4             # resident labels (lane-padded)
                 + 2 * 8 * c * 4                   # resident class weights
                 + (4 << 20))                      # misc headroom
    vmem_limit = int(min(max(vmem_bytes - (2 << 20), 16 << 20),
                         max(32 << 20, vmem_need)))

    partials = pl.pallas_call(
        kernel,
        out_shape=jax.ShapeDtypeStruct((num_tiles, 1, 128), jnp.float32),
        grid_spec=pltpu.PrefetchScalarGridSpec(
            num_scalar_prefetch=0,
            grid=(num_tiles,),
            in_specs=[
                pl.BlockSpec((tile_rows, c), lambda i: (i, 0)),   # logits: tiled over rows
                pl.BlockSpec((n_pad, 1), lambda i: (0, 0)),       # labels: resident
                pl.BlockSpec((1, c), lambda i: (0, 0)),           # class weights: resident
            ],
            out_specs=pl.BlockSpec((1, 1, 128), lambda i: (i, 0, 0)),
        ),
        compiler_params=pltpu.CompilerParams(
            dimension_semantics=("parallel",),                    # per-tile partials -> megacore ok
            vmem_limit_bytes=vmem_limit,
        ),
    )(logits, labels2d, weights2d)

    total = jnp.sum(partials[:, 0, 0])
    # torch.sum(labels_one_hot) with the smoothed one-hot targets
    denom = jnp.float32(n) * (1.0 - epsilon) + jnp.float32(n * c) * (epsilon / c)
    return total / denom


def _reference(logits, labels, beta=0.9, gamma=2.0, eps=0.1):
    """Pure-JAX mirror of the PyTorch LabelSM_Focal.forward (loss_type='focal')."""
    n, c = logits.shape
    counts = jnp.zeros((c,), jnp.float32).at[labels].add(1.0)
    effective_num = 1.0 - jnp.power(jnp.float32(beta), counts)
    weights = (1.0 - beta) / (effective_num + 1e-8)
    weights = weights / jnp.sum(weights) * c
    one_hot = jax.nn.one_hot(labels, c, dtype=jnp.float32)
    t = (1.0 - eps) * one_hot + eps / c
    alpha = jnp.sum(weights[None, :] * t, axis=1, keepdims=True)       # (N, 1)
    x = logits.astype(jnp.float32)
    sp = jnp.maximum(-x, 0.0) + jnp.log(1.0 + jnp.exp(-jnp.abs(x)))    # softplus(-x)
    bce = (1.0 - t) * x + sp
    mod = 1.0 if gamma == 0.0 else jnp.exp(-gamma * (t * x + sp))
    weighted = alpha * (mod * bce)
    return jnp.sum(weighted) / jnp.sum(t)


if __name__ == "__main__":
    key = jax.random.PRNGKey(0)
    k1, k2 = jax.random.split(key)

    N, C = 32, 16  # small shapes: batch=32, classes=16
    logits = jax.random.normal(k1, (N, C), dtype=jnp.float32)
    labels = jax.random.randint(k2, (N,), 0, C, dtype=jnp.int32)

    loss = label_sm_focal(logits, labels, beta=0.9, gamma=2.0, epsilon=0.1)
    loss = jax.block_until_ready(loss)

    ref = _reference(logits, labels, beta=0.9, gamma=2.0, eps=0.1)
    assert np.allclose(np.asarray(loss), np.asarray(ref), rtol=1e-5, atol=1e-5), (
        f"mismatch: pallas={loss} ref={ref}")

    print("KERNEL_OK")
</pallas_src>

<mosaic_0001>
module attributes {stable_mosaic.version = 11 : i64} {
  func.func @_focal_tile_kernel(%arg0: i32, %arg1: memref<32x16xf32, #tpu.memory_space<vmem>>, %arg2: memref<32x1xi32, #tpu.memory_space<vmem>>, %arg3: memref<1x16xf32, #tpu.memory_space<vmem>>, %arg4: memref<1x1x128xf32, #tpu.memory_space<vmem>>) attributes {dimension_semantics = [#tpu.dimension_semantics<parallel>], iteration_bounds = array<i64: 1>, scalar_prefetch = 0 : i64, scratch_operands = 0 : i64, tpu.core_type = #tpu.core_type<tc>, window_params = [{transform_indices = @transform_0, window_bounds = array<i64: 32, 16>}, {pipeline_mode = #tpu.pipeline_mode<synchronous>, transform_indices = @transform_1, window_bounds = array<i64: 32, 1>}, {pipeline_mode = #tpu.pipeline_mode<synchronous>, transform_indices = @transform_2, window_bounds = array<i64: 1, 16>}, {transform_indices = @transform_3, window_bounds = array<i64: 1, 1, 128>}]} {
    %c32_i32 = arith.constant 32 : i32
    %0 = arith.muli %arg0, %c32_i32 : i32
    %1 = tpu.assume_multiple %0, 32 : i32
    %c0 = arith.constant 0 : index
    %c0_0 = arith.constant 0 : index
    %2 = vector.load %arg1[%c0, %c0_0] : memref<32x16xf32, #tpu.memory_space<vmem>>, vector<32x16xf32>
    %3 = arith.index_cast %1 : i32 to index
    %c0_1 = arith.constant 0 : index
    %4 = vector.load %arg2[%3, %c0_1] : memref<32x1xi32, #tpu.memory_space<vmem>>, vector<32x1xi32>
    %c0_2 = arith.constant 0 : index
    %c0_3 = arith.constant 0 : index
    %5 = vector.load %arg3[%c0_2, %c0_3] : memref<1x16xf32, #tpu.memory_space<vmem>>, vector<1x16xf32>
    %6 = vector.shape_cast %5 : vector<1x16xf32> to vector<1x1x16xf32>
    %cst = arith.constant dense<0.000000e+00> : vector<1xf32>
    %7 = vector.multi_reduction <add>, %6, %cst [1, 2] : vector<1x1x16xf32> to vector<1xf32>
    %8 = vector.shape_cast %7 : vector<1xf32> to vector<1x1x1xf32>
    %9 = vector.extract %8[0, 0, 0] : f32 from vector<1x1x1xf32>
    %10 = tpu.iota {dimensions = array<i32: 1>} : vector<32x16xi32>
    %11 = vector.broadcast %4 : vector<32x1xi32> to vector<32x16xi32>
    %12 = arith.cmpi eq, %10, %11 : vector<32x16xi32>
    %c0_i32 = arith.constant 0 : i32
    %13 = vector.broadcast %c0_i32 : i32 to vector<32x1xi32>
    %14 = arith.cmpi sge, %4, %13 : vector<32x1xi32>
    %15 = arith.extui %14 : vector<32x1xi1> to vector<32x1xi32>
    %16 = arith.sitofp %15 : vector<32x1xi32> to vector<32x1xf32>
    %17 = arith.extui %12 : vector<32x16xi1> to vector<32x16xi32>
    %18 = arith.sitofp %17 : vector<32x16xi32> to vector<32x16xf32>
    %cst_4 = arith.constant 0.899999976 : f32
    %19 = vector.broadcast %cst_4 : f32 to vector<32x16xf32>
    %20 = arith.mulf %19, %18 : vector<32x16xf32>
    %cst_5 = arith.constant 6.250000e-03 : f32
    %21 = vector.broadcast %cst_5 : f32 to vector<32x16xf32>
    %22 = arith.addf %21, %20 : vector<32x16xf32>
    %cst_6 = arith.constant 0.000000e+00 : f32
    %23 = vector.shape_cast %5 : vector<1x16xf32> to vector<1x16xf32>
    %24 = vector.broadcast %23 : vector<1x16xf32> to vector<32x16xf32>
    %25 = vector.broadcast %cst_6 : f32 to vector<32x16xf32>
    %26 = arith.select %12, %24, %25 : vector<32x16xi1>, vector<32x16xf32>
    %cst_7 = arith.constant dense<0.000000e+00> : vector<32xf32>
    %27 = vector.multi_reduction <add>, %26, %cst_7 [1] : vector<32x16xf32> to vector<32xf32>
    %28 = vector.shape_cast %27 : vector<32xf32> to vector<32x1xf32>
    %cst_8 = arith.constant 0.899999976 : f32
    %29 = vector.broadcast %cst_8 : f32 to vector<32x1xf32>
    %30 = arith.mulf %29, %28 : vector<32x1xf32>
    %cst_9 = arith.constant 6.250000e-03 : f32
    %31 = arith.mulf %cst_9, %9 : f32
    %32 = vector.broadcast %31 : f32 to vector<32x1xf32>
    %33 = arith.addf %30, %32 : vector<32x1xf32>
    %cst_10 = arith.constant 0.000000e+00 : f32
    %34 = vector.broadcast %cst_10 : f32 to vector<32x16xf32>
    %35 = arith.subf %34, %2 : vector<32x16xf32>
    %cst_11 = arith.constant 0.000000e+00 : f32
    %36 = vector.broadcast %cst_11 : f32 to vector<32x16xf32>
    %37 = arith.maximumf %35, %36 : vector<32x16xf32>
    %38 = math.absf %2 : vector<32x16xf32>
    %cst_12 = arith.constant 0.000000e+00 : f32
    %39 = vector.broadcast %cst_12 : f32 to vector<32x16xf32>
    %40 = arith.subf %39, %38 : vector<32x16xf32>
    %41 = math.exp %40 : vector<32x16xf32>
    %cst_13 = arith.constant 1.000000e+00 : f32
    %42 = vector.broadcast %cst_13 : f32 to vector<32x16xf32>
    %43 = arith.addf %42, %41 : vector<32x16xf32>
    %44 = math.log %43 : vector<32x16xf32>
    %45 = arith.addf %37, %44 : vector<32x16xf32>
    %cst_14 = arith.constant 1.000000e+00 : f32
    %46 = vector.broadcast %cst_14 : f32 to vector<32x16xf32>
    %47 = arith.subf %46, %22 : vector<32x16xf32>
    %48 = arith.mulf %47, %2 : vector<32x16xf32>
    %49 = arith.addf %48, %45 : vector<32x16xf32>
    %50 = arith.mulf %22, %2 : vector<32x16xf32>
    %51 = arith.addf %50, %45 : vector<32x16xf32>
    %cst_15 = arith.constant -2.000000e+00 : f32
    %52 = vector.broadcast %cst_15 : f32 to vector<32x16xf32>
    %53 = arith.mulf %52, %51 : vector<32x16xf32>
    %54 = math.exp %53 : vector<32x16xf32>
    %55 = arith.mulf %54, %49 : vector<32x16xf32>
    %56 = arith.mulf %33, %16 : vector<32x1xf32>
    %57 = vector.broadcast %56 : vector<32x1xf32> to vector<32x16xf32>
    %58 = arith.mulf %57, %55 : vector<32x16xf32>
    %59 = vector.shape_cast %58 : vector<32x16xf32> to vector<1x32x16xf32>
    %cst_16 = arith.constant dense<0.000000e+00> : vector<1xf32>
    %60 = vector.multi_reduction <add>, %59, %cst_16 [1, 2] : vector<1x32x16xf32> to vector<1xf32>
    %61 = vector.shape_cast %60 : vector<1xf32> to vector<1x1x1xf32>
    %62 = vector.extract %61[0, 0, 0] : f32 from vector<1x1x1xf32>
    %63 = vector.broadcast %62 : f32 to vector<1x1x1xf32>
    %64 = vector.shape_cast %63 : vector<1x1x1xf32> to vector<1x1x1xf32>
    %65 = vector.broadcast %64 : vector<1x1x1xf32> to vector<1x1x128xf32>
    %c0_17 = arith.constant 0 : index
    %c0_18 = arith.constant 0 : index
    %c0_19 = arith.constant 0 : index
    %66 = vector.load %arg4[%c0_17, %c0_18, %c0_19] : memref<1x1x128xf32, #tpu.memory_space<vmem>>, vector<1x1x128xf32>
    tpu.vector_store %arg4[%c0_17, %c0_18, %c0_19], %65 {strides = array<i32>} : memref<1x1x128xf32, #tpu.memory_space<vmem>>, vector<1x1x128xf32>,
    return
  }
  func.func @transform_0(%arg0: i32) -> (i32, i32) {
    %c0_i32 = arith.constant 0 : i32
    %c0_i32_0 = arith.constant 0 : i32
    return %arg0, %c0_i32 : i32, i32
  }
  func.func @transform_1(%arg0: i32) -> (i32, i32) {
    %c0_i32 = arith.constant 0 : i32
    %c0_i32_0 = arith.constant 0 : i32
    %c0_i32_1 = arith.constant 0 : i32
    return %c0_i32, %c0_i32_0 : i32, i32
  }
  func.func @transform_2(%arg0: i32) -> (i32, i32) {
    %c0_i32 = arith.constant 0 : i32
    %c0_i32_0 = arith.constant 0 : i32
    %c0_i32_1 = arith.constant 0 : i32
    return %c0_i32, %c0_i32_0 : i32, i32
  }
  func.func @transform_3(%arg0: i32) -> (i32, i32, i32) {
    %c0_i32 = arith.constant 0 : i32
    %c0_i32_0 = arith.constant 0 : i32
    %c0_i32_1 = arith.constant 0 : i32
    return %arg0, %c0_i32, %c0_i32_0 : i32, i32, i32
  }
}

</mosaic_0001>

<llo_original>
// kernel: tpu_custom_call.1
$region0: #{tpu_custom_call.1}
  #allocation0 [shape = 'u32[]', space=smem, size = 0x4, offset = 0x4, fixed_abs, tag = 'smem constant byte address 0x4 - core index']
  #allocation1 [shape = 'u32[144,128]{1,0:T(1,128)}', space=vmem, size = 0x12000, scoped, tag = 'internal scratch']
  %s0 = inlined_call_operand.vmem [shape: f32[32,16], index: 0, kind: input, shape index: {}]
  %s1 = inlined_call_operand.vmem [shape: s32[32,1], index: 1, kind: input, shape index: {}]
  %s2 = inlined_call_operand.vmem [shape: f32[1,16], index: 2, kind: input, shape index: {}]
  %s3 = inlined_call_operand.hbm [shape: f32[1,1,128], index: 3, kind: output, shape index: {}]
  %s4 = sld [smem:[#allocation0]]
  $region22: #{tpu_custom_call.1} parent=0
    _
  %s6 = ssub.s32 1, %s4
  %s7 = scalar_select 0, %s6, %s4
  $region1: #{tpu_custom_call.1} parent=0
    #allocation2 [shape = 'u8[512]{0}', space=vmem, size = 0x400, scoped, tag = 'output window, operand 0, single buffered']
    #allocation3 [shape = 's32[1]{0}', space=sflag, size = 0x4, scoped, tag = 'scoped memory for tpu_custom_call.1']
    %8 = vsyncpa [#allocation3], 0
    // Predicated region
    $region2: #{tpu_custom_call.1} parent=1 // pred_check
      _
    $region3: #{tpu_custom_call.1} parent=1 // pred_check_branch
      %10 = sbr.rel (0) target = $region5
    $region4: #{tpu_custom_call.1} parent=1 // pred_region
      _
    $region5: #{tpu_custom_call.1} parent=1 // pred_fallthru
      _
    // Predicated region
    $region6: #{tpu_custom_call.1} parent=1 // pred_check
      _
    $region7: #{tpu_custom_call.1} parent=1 // pred_check_branch
      %12 = sbr.rel (0) target = $region9
    $region8: #{tpu_custom_call.1} parent=1 // pred_region
      _
    $region9: #{tpu_custom_call.1} parent=1 // pred_fallthru
      _
    // Predicated region
    $region10: #{tpu_custom_call.1} parent=1 // pred_check
      _
    $region11: #{tpu_custom_call.1} parent=1 // pred_check_branch
      %14 = sbr.rel (0) target = $region13
    $region12: #{tpu_custom_call.1} parent=1 // pred_region
      _
    $region13: #{tpu_custom_call.1} parent=1 // pred_fallthru
      _
    %s15 = smul.u32 0, 32
    %v16 = vld [vmem:[%s0] sm:$0xff]
    %v17 = vld [vmem:[%s0 + $0x8] sm:$0xff]
    %v18 = vld [vmem:[%s0 + $0x10] sm:$0xff]
    %v19 = vld [vmem:[%s0 + $0x18] sm:$0xff]
    %s20 = scalar_lea.vmem %s1, %s15
    %v21 = vld [vmem:[%s20] sm:$0xff]
    %v22 = vld [vmem:[%s20 + $0x8] sm:$0xff]
    %v23 = vld [vmem:[%s20 + $0x10] sm:$0xff]
    %v24 = vld [vmem:[%s20 + $0x18] sm:$0xff]
    %v25 = vld [vmem:[%s2] sm:$0x1]
    %vm26 = vcmask 122880
    %v27 = vsel %vm26, %v25, 0.0
    %28 = vadd.xlane.f32.xlu0 %v27
    %v29 = vpop.xlane.xlu0 %28
    %v30 = vrot.slane %v29, 4
    %v31 = vadd.f32 %v29, %v30
    %v32 = vrot.slane %v31, 2
    %v33 = vadd.f32 %v31, %v32
    %v34 = vrot.slane %v33, 1
    %v35 = vadd.f32 %v33, %v34
    %s36 = vtos %v35
    %v37 = vlaneseq
    %v38 = vand.u32 %v37, 127
    %39 = vset.pattern.permute.xlu0 0
    %40 = vperm.xlu0 %39, %v21
    %v41 = vpop.permute.xlu0 %40
    %42 = vset.pattern.permute.xlu0 0
    %43 = vperm.xlu0 %42, %v22
    %v44 = vpop.permute.xlu0 %43
    %45 = vset.pattern.permute.xlu0 0
    %46 = vperm.xlu0 %45, %v23
    %v47 = vpop.permute.xlu0 %46
    %48 = vset.pattern.permute.xlu0 0
    %49 = vperm.xlu0 %48, %v24
    %v50 = vpop.permute.xlu0 %49
    %vm51 = vcmp.eq.s32.totalorder %v38, %v41
    %vm52 = vcmp.eq.s32.totalorder %v38, %v44
    %vm53 = vcmp.eq.s32.totalorder %v38, %v47
    %vm54 = vcmp.eq.s32.totalorder %v38, %v50
    %vm55 = vcmp.ge.s32.totalorder %v21, 0
    %vm56 = vcmp.ge.s32.totalorder %v22, 0
    %vm57 = vcmp.ge.s32.totalorder %v23, 0
    %vm58 = vcmp.ge.s32.totalorder %v24, 0
    %v59 = vsel %vm55, 1, 0
    %v60 = vsel %vm56, 1, 0
    %v61 = vsel %vm57, 1, 0
    %v62 = vsel %vm58, 1, 0
    %v63 = vcvt.s32.f32 %v59
    %v64 = vcvt.s32.f32 %v60
    %v65 = vcvt.s32.f32 %v61
    %v66 = vcvt.s32.f32 %v62
    %v67 = vsel %vm51, 1, 0
    %v68 = vsel %vm52, 1, 0
    %v69 = vsel %vm53, 1, 0
    %v70 = vsel %vm54, 1, 0
    %v71 = vcvt.s32.f32 %v67
    %v72 = vcvt.s32.f32 %v68
    %v73 = vcvt.s32.f32 %v69
    %v74 = vcvt.s32.f32 %v70
    %v75 = vmul.f32 %v71, 0.9
    %v76 = vmul.f32 %v72, 0.9
    %v77 = vmul.f32 %v73, 0.9
    %v78 = vmul.f32 %v74, 0.9
    %v79 = vadd.f32 %v75, 0.00625
    %v80 = vadd.f32 %v76, 0.00625
    %v81 = vadd.f32 %v77, 0.00625
    %v82 = vadd.f32 %v78, 0.00625
    %v84 = vlaneseq
    %v85 = vshrl.u32 %v84, 7
    %v86 = vsub.s32 0, %v85
    %v87 = vrot.slane %v25, %v86
    %v89 = vsel %vm51, %v87, 0.0
    %v90 = vsel %vm52, %v87, 0.0
    %v91 = vsel %vm53, %v87, 0.0
    %v92 = vsel %vm54, %v87, 0.0
    %vm93 = vcmask 130048
    %v94 = vsel %vm93, %v89, 0.0
    %95 = vadd.xlane.f32.xlu0 %v94
    %v96 = vpop.xlane.xlu0 %95
    %v97 = vsel %vm93, %v90, 0.0
    %98 = vadd.xlane.f32.xlu0 %v97
    %v99 = vpop.xlane.xlu0 %98
    %v100 = vsel %vm93, %v91, 0.0
    %101 = vadd.xlane.f32.xlu0 %v100
    %v102 = vpop.xlane.xlu0 %101
    %v103 = vsel %vm93, %v92, 0.0
    %104 = vadd.xlane.f32.xlu0 %v103
    %v105 = vpop.xlane.xlu0 %104
    %v106 = vmul.f32 %v96, 0.9
    %v107 = vmul.f32 %v99, 0.9
    %v108 = vmul.f32 %v102, 0.9
    %v109 = vmul.f32 %v105, 0.9
    %s110 = smul.f32 %s36, 0.00625
    %v111 = vstv %s110
    %v112 = vadd.f32 %v106, %v111
    %v113 = vadd.f32 %v107, %v111
    %v114 = vadd.f32 %v108, %v111
    %v115 = vadd.f32 %v109, %v111
    %v116 = vsub.f32 0.0, %v16
    %v117 = vsub.f32 0.0, %v17
    %v118 = vsub.f32 0.0, %v18
    %v119 = vsub.f32 0.0, %v19
    %v120 = vmax.f32 %v116, 0.0
    %v121 = vmax.f32 %v117, 0.0
    %v122 = vmax.f32 %v118, 0.0
    %v123 = vmax.f32 %v119, 0.0
    %v124 = vand.u32 2147483647, %v16
    %v125 = vand.u32 2147483647, %v17
    %v126 = vand.u32 2147483647, %v18
    %v127 = vand.u32 2147483647, %v19
    %v128 = vsub.f32 0.0, %v124
    %v129 = vsub.f32 0.0, %v125
    %v130 = vsub.f32 0.0, %v126
    %v131 = vsub.f32 0.0, %v127
    %v132 = vmul.f32 %v128, 1.442695
    %v133 = vpow.pop %v132
    %v134 = vmul.f32 %v129, 1.442695
    %v135 = vpow.pop %v134
    %v136 = vmul.f32 %v130, 1.442695
    %v137 = vpow.pop %v136
    %v138 = vmul.f32 %v131, 1.442695
    %v139 = vpow.pop %v138
    %v140 = vadd.f32 %v133, 1.0
    %v141 = vadd.f32 %v135, 1.0
    %v142 = vadd.f32 %v137, 1.0
    %v143 = vadd.f32 %v139, 1.0
    %v144 = vlog2.pop %v140
    %v145 = vmul.f32 %v144, 0.6931472
    %v146 = vlog2.pop %v141
    %v147 = vmul.f32 %v146, 0.6931472
    %v148 = vlog2.pop %v142
    %v149 = vmul.f32 %v148, 0.6931472
    %v150 = vlog2.pop %v143
    %v151 = vmul.f32 %v150, 0.6931472
    %v152 = vadd.f32 %v120, %v145
    %v153 = vadd.f32 %v121, %v147
    %v154 = vadd.f32 %v122, %v149
    %v155 = vadd.f32 %v123, %v151
    %v156 = vsub.f32 1.0, %v79
    %v157 = vsub.f32 1.0, %v80
    %v158 = vsub.f32 1.0, %v81
    %v159 = vsub.f32 1.0, %v82
    %v160 = vmul.f32 %v156, %v16
    %v161 = vmul.f32 %v157, %v17
    %v162 = vmul.f32 %v158, %v18
    %v163 = vmul.f32 %v159, %v19
    %v164 = vadd.f32 %v160, %v152
    %v165 = vadd.f32 %v161, %v153
    %v166 = vadd.f32 %v162, %v154
    %v167 = vadd.f32 %v163, %v155
    %v168 = vmul.f32 %v79, %v16
    %v169 = vmul.f32 %v80, %v17
    %v170 = vmul.f32 %v81, %v18
    %v171 = vmul.f32 %v82, %v19
    %v172 = vadd.f32 %v168, %v152
    %v173 = vadd.f32 %v169, %v153
    %v174 = vadd.f32 %v170, %v154
    %v175 = vadd.f32 %v171, %v155
    %v176 = vmul.f32 %v172, -2.0
    %v177 = vmul.f32 %v173, -2.0
    %v178 = vmul.f32 %v174, -2.0
    %v179 = vmul.f32 %v175, -2.0
    %v180 = vmul.f32 %v176, 1.442695
    %v181 = vpow.pop %v180
    %v182 = vmul.f32 %v177, 1.442695
    %v183 = vpow.pop %v182
    %v184 = vmul.f32 %v178, 1.442695
    %v185 = vpow.pop %v184
    %v186 = vmul.f32 %v179, 1.442695
    %v187 = vpow.pop %v186
    %v188 = vmul.f32 %v181, %v164
    %v189 = vmul.f32 %v183, %v165
    %v190 = vmul.f32 %v185, %v166
    %v191 = vmul.f32 %v187, %v167
    %v192 = vmul.f32 %v112, %v63
    %v193 = vmul.f32 %v113, %v64
    %v194 = vmul.f32 %v114, %v65
    %v195 = vmul.f32 %v115, %v66
    %197 = vset.pattern.permute.xlu0 0
    %198 = vperm.xlu0 %197, %v192
    %v199 = vpop.permute.xlu0 %198
    %202 = vset.pattern.permute.xlu0 0
    %203 = vperm.xlu0 %202, %v193
    %v204 = vpop.permute.xlu0 %203
    %207 = vset.pattern.permute.xlu0 0
    %208 = vperm.xlu0 %207, %v194
    %v209 = vpop.permute.xlu0 %208
    %212 = vset.pattern.permute.xlu0 0
    %213 = vperm.xlu0 %212, %v195
    %v214 = vpop.permute.xlu0 %213
    %v216 = vmul.f32 %v199, %v188
    %v217 = vmul.f32 %v204, %v189
    %v218 = vmul.f32 %v209, %v190
    %v219 = vmul.f32 %v214, %v191
    %v220 = vsel %vm93, %v216, 0.0
    %v221 = vsel %vm93, %v217, 0.0
    %v222 = vadd.f32 %v220, %v221
    %v223 = vsel %vm93, %v218, 0.0
    %v224 = vadd.f32 %v222, %v223
    %v225 = vsel %vm93, %v219, 0.0
    %v226 = vadd.f32 %v224, %v225
    %227 = vadd.xlane.f32.xlu0 %v226
    %v228 = vpop.xlane.xlu0 %227
    %v229 = vrot.slane %v228, 4
    %v230 = vadd.f32 %v228, %v229
    %v231 = vrot.slane %v230, 2
    %v232 = vadd.f32 %v230, %v231
    %v233 = vrot.slane %v232, 1
    %v234 = vadd.f32 %v232, %v233
    %s235 = vtos %v234
    %v236 = vstv %s235
    %237 = vst [vmem:[#allocation2] sm:$0x1] %v236
    // Predicated region
    $region14: #{tpu_custom_call.1} parent=1 // pred_check
      _
    $region15: #{tpu_custom_call.1} parent=1 // pred_check_branch
      %239 = sbr.rel (0) target = $region17
    $region16: #{tpu_custom_call.1} parent=1 // pred_region
      %s241 = ssub.s32 16, 16
      %242 = vsyncadd [#allocation3], %s241
      %s244 = sshll.u32 [#allocation2], 4
      %s245 = int_to_ptr.vmem [resolvable:$true] %s244
      %247 = dma.vmem_to_hbm [thread:$0]  %s245, 16, %s3, [#allocation3]
    $region17: #{tpu_custom_call.1} parent=1 // pred_fallthru
      _
    // Predicated region
    $region18: #{tpu_custom_call.1} parent=1 // pred_check
      _
    $region19: #{tpu_custom_call.1} parent=1 // pred_check_branch
      %249 = sbr.rel (0) target = $region21
    $region20: #{tpu_custom_call.1} parent=1 // pred_region
      %250 = dma.done [#allocation3], 16
    $region21: #{tpu_custom_call.1} parent=1 // pred_fallthru
      _
    %251 = vsyncpa [#allocation3], 1

</llo_original>
